<compile_context>
chip_gen: v5e
topology: v5e:2x2
jax: 0.10.0
libtpu: 0.0.40
codegen_flags: <defaults>
</compile_context>

<pallas_src>
import math

import jax
import jax.numpy as jnp
from jax.experimental import pallas as pl
from jax.experimental.pallas import tpu as pltpu


# ----------------------------------------------------------------------------
# In-kernel helpers
# ----------------------------------------------------------------------------
def _affine(x, w, b):
    """z = x @ w + b for a tiny contraction dim.

    With the embed layer fused into the fourier weights, K == s_dim (3 by
    default): an MXU pass would waste ~125/128 of the contraction, so for
    K <= 8 we unroll a VPU broadcast-MAC (exact f32, no MXU latency)."""
    k = x.shape[1]
    if k <= 8:
        z = b + x[:, 0:1] * w[0:1, :]
        for i in range(1, k):
            z = z + x[:, i:i + 1] * w[i:i + 1, :]
        return z
    return jnp.dot(x, w, preferred_element_type=jnp.float32) + b


# ----------------------------------------------------------------------------
# Kernels
# ----------------------------------------------------------------------------
def _rfv_forward_kernel(x_ref, wc_ref, bc_ref, ow_ref, ob_ref, q_ref):
    """x:(tb,s) -> z:(tb,2F) -> cos -> per-head lane reduction -> q:(tb,2)."""
    x = x_ref[...].astype(jnp.float32)
    z = _affine(x, wc_ref[...], bc_ref[...])
    phi = jnp.cos(z)                               # (tb, 2F) = [phi1 | phi2]
    prod = phi * ow_ref[...]                       # [phi1*o1_w | phi2*o2_w]
    feat = prod.shape[-1] // 2
    q1 = jnp.sum(prod[:, :feat], axis=-1, keepdims=True)
    q2 = jnp.sum(prod[:, feat:], axis=-1, keepdims=True)
    q = jnp.concatenate([q1, q2], axis=-1) + ob_ref[...]
    q_ref[...] = q.astype(q_ref.dtype)


def _rfv_phi_kernel(x_ref, wc_ref, bc_ref, phi_ref):
    """Fused get_phi: one lane-dense (tb, 2F) output = [cos(z1) | cos(z2)]."""
    x = x_ref[...].astype(jnp.float32)
    z = _affine(x, wc_ref[...], bc_ref[...])
    phi_ref[...] = jnp.cos(z).astype(phi_ref.dtype)


# ----------------------------------------------------------------------------
# Tiling / padding policy
# ----------------------------------------------------------------------------
def _round_up(n, m):
    return ((n + m - 1) // m) * m


def _choose_tiling(batch, max_tile):
    """Return (row tile, padded batch).

    Guarantees >= 2 grid programs whenever the batch can be split into two
    8-row-aligned blocks (so dimension_semantics=("parallel",) can shard
    across v7x's two TensorCores); caps the tile at max_tile so large batches
    amortize per-step pipeline overhead without blowing VMEM.  Ragged batches
    are padded to the tile rather than collapsed into one giant block."""
    if batch <= 8:
        tb = 8
    else:
        tb = min(max_tile, _round_up(pl.cdiv(batch, 2), 8))
    padded = _round_up(batch, tb)
    return tb, padded


def _maybe_pad_rows(x, padded):
    if padded == x.shape[0]:
        return x
    return jnp.pad(x, ((0, padded - x.shape[0]), (0, 0)))


# ----------------------------------------------------------------------------
# Host-side weight fusion (exact linear composition, done once per update)
# ----------------------------------------------------------------------------
def fuse_params(p):
    fw = jnp.concatenate([p["f1_w"], p["f2_w"]], axis=1)        # (emb, 2F)
    fb = jnp.concatenate([p["f1_b"], p["f2_b"]], axis=1)        # (1, 2F)
    wc = jnp.dot(p["embed_w"], fw,
                 precision=jax.lax.Precision.HIGHEST)           # (s_dim, 2F)
    bc = jnp.dot(p["embed_b"], fw,
                 precision=jax.lax.Precision.HIGHEST) + fb      # (1, 2F)
    ow = jnp.concatenate([p["o1_w"], p["o2_w"]], axis=1)        # (1, 2F)
    ob = jnp.concatenate([p["o1_b"], p["o2_b"]], axis=1)        # (1, 2)
    return {"wc": wc, "bc": bc, "ow": ow, "ob": ob}


# ----------------------------------------------------------------------------
# Wrappers
# ----------------------------------------------------------------------------
def rfv_forward(states, fused, *, max_tile=512):
    batch, s_dim = states.shape
    two_f = fused["wc"].shape[1]
    tb, padded = _choose_tiling(batch, max_tile)
    xs = _maybe_pad_rows(states, padded)

    q = pl.pallas_call(
        _rfv_forward_kernel,
        out_shape=jax.ShapeDtypeStruct((padded, 2), states.dtype),
        grid=(padded // tb,),
        in_specs=[
            pl.BlockSpec((tb, s_dim), lambda i: (i, 0)),
            pl.BlockSpec((s_dim, two_f), lambda i: (0, 0)),   # fused W
            pl.BlockSpec((1, two_f), lambda i: (0, 0)),       # fused b
            pl.BlockSpec((1, two_f), lambda i: (0, 0)),       # head weights
            pl.BlockSpec((1, 2), lambda i: (0, 0)),           # head biases
        ],
        out_specs=pl.BlockSpec((tb, 2), lambda i: (i, 0)),
        compiler_params=pltpu.CompilerParams(
            dimension_semantics=("parallel",)),
    )(xs, fused["wc"], fused["bc"], fused["ow"], fused["ob"])
    if padded != batch:
        q = q[:batch]
    return q[:, 0:1], q[:, 1:2]


def rfv_get_phi(states, fused, *, max_tile=1024, out_dtype=None):
    batch, s_dim = states.shape
    two_f = fused["wc"].shape[1]
    feat = two_f // 2
    out_dtype = states.dtype if out_dtype is None else out_dtype
    tb, padded = _choose_tiling(batch, max_tile)
    xs = _maybe_pad_rows(states, padded)

    phi = pl.pallas_call(
        _rfv_phi_kernel,
        out_shape=jax.ShapeDtypeStruct((padded, two_f), out_dtype),
        grid=(padded // tb,),
        in_specs=[
            pl.BlockSpec((tb, s_dim), lambda i: (i, 0)),
            pl.BlockSpec((s_dim, two_f), lambda i: (0, 0)),
            pl.BlockSpec((1, two_f), lambda i: (0, 0)),
        ],
        out_specs=pl.BlockSpec((tb, two_f), lambda i: (i, 0)),
        compiler_params=pltpu.CompilerParams(
            dimension_semantics=("parallel",)),
    )(xs, fused["wc"], fused["bc"])
    if padded != batch:
        phi = phi[:batch]
    return phi[:, :feat], phi[:, feat:]


@jax.jit
def _soft_update_tree(params, target_params, update_rate):
    # params_i <- rate * params_i + (1 - rate) * target_i  (f32 blend).
    # Per perf review: parameter tree is ~KBs -> dispatch-bound; let XLA fuse.
    rate = jnp.asarray(update_rate, jnp.float32)
    return jax.tree_util.tree_map(
        lambda p1, p2: (rate * p1.astype(jnp.float32)
                        + (1.0 - rate) * p2.astype(jnp.float32)).astype(p1.dtype),
        params, target_params)


# ----------------------------------------------------------------------------
# Parameter init (mirrors the PyTorch __init__), stored pre-transposed
# ----------------------------------------------------------------------------
def init_rfv_critic_params(key, s_dim=3, embedding_dim=-1, rf_num=256,
                           sigma=0.0):
    k_ew, k_eb, k_f1w, k_f1b, k_f2w, k_f2b, k_o1, k_o2 = jax.random.split(key, 8)
    if embedding_dim != -1:
        emb = embedding_dim
        bound = 1.0 / math.sqrt(s_dim)                 # nn.Linear default init
        embed_w = jax.random.uniform(k_ew, (s_dim, emb), jnp.float32,
                                     -bound, bound)
        embed_b = jax.random.uniform(k_eb, (1, emb), jnp.float32,
                                     -bound, bound)
    else:
        emb = s_dim
        embed_w = jnp.eye(s_dim, dtype=jnp.float32)    # init.eye_ / zeros_
        embed_b = jnp.zeros((1, s_dim), jnp.float32)
    std = (1.0 / sigma) if sigma > 0 else 1.0
    f1_w = std * jax.random.normal(k_f1w, (emb, rf_num), jnp.float32)
    f1_b = jax.random.uniform(k_f1b, (1, rf_num), jnp.float32, 0.0, 2 * math.pi)
    f2_w = std * jax.random.normal(k_f2w, (emb, rf_num), jnp.float32)
    f2_b = jax.random.uniform(k_f2b, (1, rf_num), jnp.float32, 0.0, 2 * math.pi)
    ob = 1.0 / math.sqrt(rf_num)                       # nn.Linear default init
    o1_w = jax.random.uniform(k_o1, (1, rf_num), jnp.float32, -ob, ob)
    o2_w = jax.random.uniform(k_o2, (1, rf_num), jnp.float32, -ob, ob)
    o1_b = jnp.zeros((1, 1), jnp.float32)              # init.zeros_, frozen
    o2_b = jnp.zeros((1, 1), jnp.float32)
    return {"embed_w": embed_w, "embed_b": embed_b,
            "f1_w": f1_w, "f1_b": f1_b, "f2_w": f2_w, "f2_b": f2_b,
            "o1_w": o1_w, "o1_b": o1_b, "o2_w": o2_w, "o2_b": o2_b}


# ----------------------------------------------------------------------------
# Module
# ----------------------------------------------------------------------------
class RFVCriticNoLayerNorm:
    """JAX/Pallas mirror of RFVCritic_no_layer_norm (RLNetwork subclass)."""

    def __init__(self, s_dim=3, embedding_dim=-1, rf_num=256, sigma=0.0,
                 learn_rf=False, *, key):
        self.n_layers = 1
        self.feature_dim = rf_num
        self.sigma = sigma
        self.learn_rf = learn_rf   # requires_grad flags: training-time only
        self.params = init_rfv_critic_params(key, s_dim, embedding_dim,
                                             rf_num, sigma)
        self._fused = fuse_params(self.params)

    def forward(self, states):
        return rfv_forward(states, self._fused)

    def get_phi(self, states):
        return rfv_get_phi(states, self._fused)

    def get_norm(self):
        # TODO(synk): torch.norm(self.output1) norms an nn.Module; interpreted
        # here as the Frobenius norm of the output-layer weight (bias is 0).
        return (jnp.linalg.norm(self.params["o1_w"]),
                jnp.linalg.norm(self.params["o2_w"]))

    def soft_update(self, target_params, update_rate):
        self.params = _soft_update_tree(self.params, target_params,
                                        update_rate)
        self._fused = fuse_params(self.params)
        return self.params

    # TODO(synk): RLNetwork.train(loss, optimizer) is host-side autograd /
    # optimizer bookkeeping (loss.backward / optimizer.step); no kernel.


# ----------------------------------------------------------------------------
# Reference (pure jnp, composed per-layer like the PyTorch module)
# ----------------------------------------------------------------------------
def _forward_reference(states, p):
    hp = jax.lax.Precision.HIGHEST
    e = jnp.dot(states, p["embed_w"], precision=hp) + p["embed_b"]
    z1 = jnp.dot(e, p["f1_w"], precision=hp) + p["f1_b"]
    z2 = jnp.dot(e, p["f2_w"], precision=hp) + p["f2_b"]
    phi1, phi2 = jnp.cos(z1), jnp.cos(z2)
    q1 = jnp.sum(phi1 * p["o1_w"], axis=-1, keepdims=True) + p["o1_b"]
    q2 = jnp.sum(phi2 * p["o2_w"], axis=-1, keepdims=True) + p["o2_b"]
    return (q1, q2), (phi1, phi2)


# ----------------------------------------------------------------------------
# Demo
# ----------------------------------------------------------------------------
if __name__ == "__main__":
    key = jax.random.PRNGKey(0)
    k_params, k_target, k_states, k_big = jax.random.split(key, 4)

    s_dim, rf_num, batch = 3, 256, 2
    critic = RFVCriticNoLayerNorm(s_dim=s_dim, rf_num=rf_num, sigma=0.0,
                                  key=k_params)

    # forward + get_phi (small batch -> one padded 8-row block)
    states = jax.random.normal(k_states, (batch, s_dim), dtype=jnp.float32)
    q1, q2 = critic.forward(states)
    phi1, phi2 = critic.get_phi(states)
    jax.block_until_ready((q1, q2, phi1, phi2))
    (q1_r, q2_r), (phi1_r, phi2_r) = _forward_reference(states, critic.params)
    assert q1.shape == (batch, 1) and q2.shape == (batch, 1)
    assert phi1.shape == (batch, rf_num) and phi2.shape == (batch, rf_num)
    assert jnp.allclose(q1, q1_r, atol=1e-3, rtol=1e-3), "q1 mismatch"
    assert jnp.allclose(q2, q2_r, atol=1e-3, rtol=1e-3), "q2 mismatch"
    assert jnp.allclose(phi1, phi1_r, atol=1e-3, rtol=1e-3), "phi1 mismatch"
    assert jnp.allclose(phi2, phi2_r, atol=1e-3, rtol=1e-3), "phi2 mismatch"

    # multi-block parallel grid (batch 32 -> 2 blocks of 16 rows)
    states_big = jax.random.normal(k_big, (32, s_dim), dtype=jnp.float32)
    qb1, qb2 = critic.forward(states_big)
    jax.block_until_ready((qb1, qb2))
    (qb1_r, qb2_r), _ = _forward_reference(states_big, critic.params)
    assert jnp.allclose(qb1, qb1_r, atol=1e-3, rtol=1e-3), "tiled q1 mismatch"
    assert jnp.allclose(qb2, qb2_r, atol=1e-3, rtol=1e-3), "tiled q2 mismatch"

    # soft_update against a target critic's parameters
    target = RFVCriticNoLayerNorm(s_dim=s_dim, rf_num=rf_num, sigma=0.0,
                                  key=k_target)
    rate = 0.005
    expected = jax.tree_util.tree_map(
        lambda p1, p2: rate * p1 + (1.0 - rate) * p2,
        critic.params, target.params)
    updated = critic.soft_update(target.params, rate)
    jax.block_until_ready(updated)
    for got, want in zip(jax.tree_util.tree_leaves(updated),
                         jax.tree_util.tree_leaves(expected)):
        assert jnp.allclose(got, want, atol=1e-6), "soft_update mismatch"

    print("KERNEL_OK")
</pallas_src>

<mosaic_0001>
module attributes {stable_mosaic.version = 11 : i64} {
  func.func @_rfv_forward_kernel(%arg0: i32, %arg1: memref<8x3xf32, #tpu.memory_space<vmem>>, %arg2: memref<3x512xf32, #tpu.memory_space<vmem>>, %arg3: memref<1x512xf32, #tpu.memory_space<vmem>>, %arg4: memref<1x512xf32, #tpu.memory_space<vmem>>, %arg5: memref<1x2xf32, #tpu.memory_space<vmem>>, %arg6: memref<8x2xf32, #tpu.memory_space<vmem>>) attributes {dimension_semantics = [#tpu.dimension_semantics<parallel>], iteration_bounds = array<i64: 1>, scalar_prefetch = 0 : i64, scratch_operands = 0 : i64, tpu.core_type = #tpu.core_type<tc>, window_params = [{transform_indices = @transform_0, window_bounds = array<i64: 8, 3>}, {pipeline_mode = #tpu.pipeline_mode<synchronous>, transform_indices = @transform_1, window_bounds = array<i64: 3, 512>}, {pipeline_mode = #tpu.pipeline_mode<synchronous>, transform_indices = @transform_2, window_bounds = array<i64: 1, 512>}, {pipeline_mode = #tpu.pipeline_mode<synchronous>, transform_indices = @transform_3, window_bounds = array<i64: 1, 512>}, {pipeline_mode = #tpu.pipeline_mode<synchronous>, transform_indices = @transform_4, window_bounds = array<i64: 1, 2>}, {transform_indices = @transform_5, window_bounds = array<i64: 8, 2>}]} {
    %c0 = arith.constant 0 : index
    %c0_0 = arith.constant 0 : index
    %0 = vector.load %arg1[%c0, %c0_0] : memref<8x3xf32, #tpu.memory_space<vmem>>, vector<8x3xf32>
    %c0_1 = arith.constant 0 : index
    %c0_2 = arith.constant 0 : index
    %1 = vector.load %arg2[%c0_1, %c0_2] : memref<3x512xf32, #tpu.memory_space<vmem>>, vector<3x512xf32>
    %c0_3 = arith.constant 0 : index
    %c0_4 = arith.constant 0 : index
    %2 = vector.load %arg3[%c0_3, %c0_4] : memref<1x512xf32, #tpu.memory_space<vmem>>, vector<1x512xf32>
    %3 = vector.extract_strided_slice %0 {offsets = [0, 0], sizes = [8, 1], strides = [1, 1]} : vector<8x3xf32> to vector<8x1xf32>
    %4 = vector.extract_strided_slice %1 {offsets = [0, 0], sizes = [1, 512], strides = [1, 1]} : vector<3x512xf32> to vector<1x512xf32>
    %5 = vector.broadcast %3 : vector<8x1xf32> to vector<8x512xf32>
    %6 = vector.broadcast %4 : vector<1x512xf32> to vector<8x512xf32>
    %7 = arith.mulf %5, %6 : vector<8x512xf32>
    %8 = vector.broadcast %2 : vector<1x512xf32> to vector<8x512xf32>
    %9 = arith.addf %8, %7 : vector<8x512xf32>
    %10 = vector.extract_strided_slice %0 {offsets = [0, 1], sizes = [8, 1], strides = [1, 1]} : vector<8x3xf32> to vector<8x1xf32>
    %11 = vector.extract_strided_slice %1 {offsets = [1, 0], sizes = [1, 512], strides = [1, 1]} : vector<3x512xf32> to vector<1x512xf32>
    %12 = vector.broadcast %10 : vector<8x1xf32> to vector<8x512xf32>
    %13 = vector.broadcast %11 : vector<1x512xf32> to vector<8x512xf32>
    %14 = arith.mulf %12, %13 : vector<8x512xf32>
    %15 = arith.addf %9, %14 : vector<8x512xf32>
    %16 = vector.extract_strided_slice %0 {offsets = [0, 2], sizes = [8, 1], strides = [1, 1]} : vector<8x3xf32> to vector<8x1xf32>
    %17 = vector.extract_strided_slice %1 {offsets = [2, 0], sizes = [1, 512], strides = [1, 1]} : vector<3x512xf32> to vector<1x512xf32>
    %18 = vector.broadcast %16 : vector<8x1xf32> to vector<8x512xf32>
    %19 = vector.broadcast %17 : vector<1x512xf32> to vector<8x512xf32>
    %20 = arith.mulf %18, %19 : vector<8x512xf32>
    %21 = arith.addf %15, %20 : vector<8x512xf32>
    %22 = math.cos %21 : vector<8x512xf32>
    %c0_5 = arith.constant 0 : index
    %c0_6 = arith.constant 0 : index
    %23 = vector.load %arg4[%c0_5, %c0_6] : memref<1x512xf32, #tpu.memory_space<vmem>>, vector<1x512xf32>
    %24 = vector.broadcast %23 : vector<1x512xf32> to vector<8x512xf32>
    %25 = arith.mulf %22, %24 : vector<8x512xf32>
    %26 = vector.extract_strided_slice %25 {offsets = [0, 0], sizes = [8, 256], strides = [1, 1]} : vector<8x512xf32> to vector<8x256xf32>
    %cst = arith.constant dense<0.000000e+00> : vector<8xf32>
    %27 = vector.multi_reduction <add>, %26, %cst [1] : vector<8x256xf32> to vector<8xf32>
    %28 = vector.shape_cast %27 : vector<8xf32> to vector<8x1xf32>
    %29 = vector.extract_strided_slice %25 {offsets = [0, 256], sizes = [8, 256], strides = [1, 1]} : vector<8x512xf32> to vector<8x256xf32>
    %cst_7 = arith.constant dense<0.000000e+00> : vector<8xf32>
    %30 = vector.multi_reduction <add>, %29, %cst_7 [1] : vector<8x256xf32> to vector<8xf32>
    %31 = vector.shape_cast %30 : vector<8xf32> to vector<8x1xf32>
    %32 = tpu.concatenate %28, %31 in 1 : vector<8x1xf32>, vector<8x1xf32> -> vector<8x2xf32>
    %c0_8 = arith.constant 0 : index
    %c0_9 = arith.constant 0 : index
    %33 = vector.load %arg5[%c0_8, %c0_9] : memref<1x2xf32, #tpu.memory_space<vmem>>, vector<1x2xf32>
    %34 = vector.broadcast %33 : vector<1x2xf32> to vector<8x2xf32>
    %35 = arith.addf %32, %34 : vector<8x2xf32>
    %c0_10 = arith.constant 0 : index
    %c0_11 = arith.constant 0 : index
    %36 = vector.load %arg6[%c0_10, %c0_11] : memref<8x2xf32, #tpu.memory_space<vmem>>, vector<8x2xf32>
    tpu.vector_store %arg6[%c0_10, %c0_11], %35 {strides = array<i32>} : memref<8x2xf32, #tpu.memory_space<vmem>>, vector<8x2xf32>,
    return
  }
  func.func @transform_0(%arg0: i32) -> (i32, i32) {
    %c0_i32 = arith.constant 0 : i32
    %c0_i32_0 = arith.constant 0 : i32
    return %arg0, %c0_i32 : i32, i32
  }
  func.func @transform_1(%arg0: i32) -> (i32, i32) {
    %c0_i32 = arith.constant 0 : i32
    %c0_i32_0 = arith.constant 0 : i32
    %c0_i32_1 = arith.constant 0 : i32
    return %c0_i32, %c0_i32_0 : i32, i32
  }
  func.func @transform_2(%arg0: i32) -> (i32, i32) {
    %c0_i32 = arith.constant 0 : i32
    %c0_i32_0 = arith.constant 0 : i32
    %c0_i32_1 = arith.constant 0 : i32
    return %c0_i32, %c0_i32_0 : i32, i32
  }
  func.func @transform_3(%arg0: i32) -> (i32, i32) {
    %c0_i32 = arith.constant 0 : i32
    %c0_i32_0 = arith.constant 0 : i32
    %c0_i32_1 = arith.constant 0 : i32
    return %c0_i32, %c0_i32_0 : i32, i32
  }
  func.func @transform_4(%arg0: i32) -> (i32, i32) {
    %c0_i32 = arith.constant 0 : i32
    %c0_i32_0 = arith.constant 0 : i32
    %c0_i32_1 = arith.constant 0 : i32
    return %c0_i32, %c0_i32_0 : i32, i32
  }
  func.func @transform_5(%arg0: i32) -> (i32, i32) {
    %c0_i32 = arith.constant 0 : i32
    %c0_i32_0 = arith.constant 0 : i32
    return %arg0, %c0_i32 : i32, i32
  }
}

</mosaic_0001>

<llo_original>
// kernel: tpu_custom_call.1
$region0: #{tpu_custom_call.1}
  #allocation0 [shape = 'u32[]', space=smem, size = 0x4, offset = 0x4, fixed_abs, tag = 'smem constant byte address 0x4 - core index']
  #allocation1 [shape = 'u32[72,128]{1,0:T(1,128)}', space=vmem, size = 0x9000, scoped, tag = 'internal scratch']
  %s0 = inlined_call_operand.vmem [shape: f32[8,3], index: 0, kind: input, shape index: {}]
  %s1 = inlined_call_operand.hbm [shape: f32[3,512], index: 1, kind: input, shape index: {}]
  %s2 = inlined_call_operand.vmem [shape: f32[1,512], index: 2, kind: input, shape index: {}]
  %s3 = inlined_call_operand.vmem [shape: f32[1,512], index: 3, kind: input, shape index: {}]
  %s4 = inlined_call_operand.vmem [shape: f32[1,2], index: 4, kind: input, shape index: {}]
  %s5 = inlined_call_operand.vmem [shape: f32[8,2], index: 5, kind: output, shape index: {}]
  %s6 = sld [smem:[#allocation0]]
  $region34: #{tpu_custom_call.1} parent=0
    _
  %s8 = ssub.s32 1, %s6
  %s9 = scalar_select 0, %s8, %s6
  $region1: #{tpu_custom_call.1} parent=0
    #allocation2 [shape = 'u8[8192]{0}', space=vmem, size = 0x2000, scoped, tag = 'input window, operand 1, single buffered']
    #allocation3 [shape = 's32[1]{0}', space=sflag, size = 0x4, scoped, tag = 'scoped memory for tpu_custom_call.1']
    %10 = vsyncpa [#allocation3], 0
    // Predicated region
    $region2: #{tpu_custom_call.1} parent=1 // pred_check
      _
    $region3: #{tpu_custom_call.1} parent=1 // pred_check_branch
      %12 = sbr.rel (0) target = $region5
    $region4: #{tpu_custom_call.1} parent=1 // pred_region
      _
    $region5: #{tpu_custom_call.1} parent=1 // pred_fallthru
      _
    // Predicated region
    $region6: #{tpu_custom_call.1} parent=1 // pred_check
      _
    $region7: #{tpu_custom_call.1} parent=1 // pred_check_branch
      %14 = sbr.rel (0) target = $region9
    $region8: #{tpu_custom_call.1} parent=1 // pred_region
      %16 = vsyncadd [#allocation3], 0
      %s18 = sshll.u32 %s1, 4
      %s19 = int_to_ptr.hbm [resolvable:$true] %s18
      %s20 = sshll.u32 [#allocation2], 4
      %s21 = int_to_ptr.vmem [resolvable:$true] %s20
      %23 = dma.hbm_to_vmem [thread:$0]  %s19, 256, %s21, [#allocation3]
    $region9: #{tpu_custom_call.1} parent=1 // pred_fallthru
      _
    // Predicated region
    $region10: #{tpu_custom_call.1} parent=1 // pred_check
      _
    $region11: #{tpu_custom_call.1} parent=1 // pred_check_branch
      %25 = sbr.rel (0) target = $region13
    $region12: #{tpu_custom_call.1} parent=1 // pred_region
      _
    $region13: #{tpu_custom_call.1} parent=1 // pred_fallthru
      _
    // Predicated region
    $region14: #{tpu_custom_call.1} parent=1 // pred_check
      _
    $region15: #{tpu_custom_call.1} parent=1 // pred_check_branch
      %27 = sbr.rel (0) target = $region17
    $region16: #{tpu_custom_call.1} parent=1 // pred_region
      _
    $region17: #{tpu_custom_call.1} parent=1 // pred_fallthru
      _
    // Predicated region
    $region18: #{tpu_custom_call.1} parent=1 // pred_check
      _
    $region19: #{tpu_custom_call.1} parent=1 // pred_check_branch
      %29 = sbr.rel (0) target = $region21
    $region20: #{tpu_custom_call.1} parent=1 // pred_region
      _
    $region21: #{tpu_custom_call.1} parent=1 // pred_fallthru
      _
    // Predicated region
    $region22: #{tpu_custom_call.1} parent=1 // pred_check
      _
    $region23: #{tpu_custom_call.1} parent=1 // pred_check_branch
      %31 = sbr.rel (0) target = $region25
    $region24: #{tpu_custom_call.1} parent=1 // pred_region
      %33 = dma.done [#allocation3], 256
    $region25: #{tpu_custom_call.1} parent=1 // pred_fallthru
      _
    %v34 = vld [vmem:[%s0] sm:$0xff]
    %v35 = vld [vmem:[#allocation2] sm:$0x77]
    %v36 = vld [vmem:[#allocation2 + $0x8] sm:$0x77]
    %v37 = vld [vmem:[%s2] sm:$0xf]
    %39 = vset.pattern.permute.xlu0 0
    %40 = vperm.xlu0 %39, %v34
    %v41 = vpop.permute.xlu0 %40
    %v45 = vperm.slane %v35, 0
    %v46 = vperm.slane %v35, 4
    %v47 = vperm.slane %v36, 0
    %v48 = vperm.slane %v36, 4
    %v53 = vperm.slane %v45, 0
    %v54 = vperm.slane %v46, 0
    %v55 = vperm.slane %v47, 0
    %v56 = vperm.slane %v48, 0
    %v57 = vmul.f32 %v41, %v53
    %v58 = vmul.f32 %v41, %v54
    %v59 = vmul.f32 %v41, %v55
    %v60 = vmul.f32 %v41, %v56
    %v62 = vperm.slane %v37, 0
    %v63 = vperm.slane %v37, 1
    %v64 = vperm.slane %v37, 2
    %v65 = vperm.slane %v37, 3
    %v70 = vadd.f32 %v62, %v57
    %v71 = vadd.f32 %v63, %v58
    %v72 = vadd.f32 %v64, %v59
    %v73 = vadd.f32 %v65, %v60
    %74 = vset.pattern.permute.xlu0 1
    %75 = vperm.xlu0 %74, %v34
    %v76 = vpop.permute.xlu0 %75
    %v78 = vperm.slane %v35, 1
    %v79 = vperm.slane %v35, 5
    %v80 = vperm.slane %v36, 1
    %v81 = vperm.slane %v36, 5
    %v86 = vperm.slane %v78, 1
    %v87 = vperm.slane %v79, 1
    %v88 = vperm.slane %v80, 1
    %v89 = vperm.slane %v81, 1
    %v90 = vmul.f32 %v76, %v86
    %v91 = vmul.f32 %v76, %v87
    %v92 = vmul.f32 %v76, %v88
    %v93 = vmul.f32 %v76, %v89
    %v94 = vadd.f32 %v70, %v90
    %v95 = vadd.f32 %v71, %v91
    %v96 = vadd.f32 %v72, %v92
    %v97 = vadd.f32 %v73, %v93
    %98 = vset.pattern.permute.xlu0 2
    %99 = vperm.xlu0 %98, %v34
    %v100 = vpop.permute.xlu0 %99
    %v102 = vperm.slane %v35, 2
    %v103 = vperm.slane %v35, 6
    %v104 = vperm.slane %v36, 2
    %v105 = vperm.slane %v36, 6
    %v110 = vperm.slane %v102, 2
    %v111 = vperm.slane %v103, 2
    %v112 = vperm.slane %v104, 2
    %v113 = vperm.slane %v105, 2
    %v114 = vmul.f32 %v100, %v110
    %v115 = vmul.f32 %v100, %v111
    %v116 = vmul.f32 %v100, %v112
    %v117 = vmul.f32 %v100, %v113
    %v118 = vadd.f32 %v94, %v114
    %v119 = vadd.f32 %v95, %v115
    %v120 = vadd.f32 %v96, %v116
    %v121 = vadd.f32 %v97, %v117
    %v122 = vand.u32 2147483647, %v118
    %vm123 = vcmp.le.f32.partialorder %v122, 0.7853982
    %vm124 = vcmp.lt.s32.totalorder %v118, 0
    %v125 = vand.u32 %v118, 2139095040
    %v126 = vshrl.u32 %v125, 23
    %v127 = vsub.s32 %v126, 127
    %v128 = vand.u32 2147483647, %v118
    %v129 = vand.u32 %v128, 8388607
    %v130 = vor.u32 %v129, 8388608
    %v131 = vsub.s32 0, %v130
    %v132 = vadd.s32 %v127, 1
    %vm133 = vcmp.gt.s32.totalorder %v132, 0
    %v134 = vsel %vm133, %v132, 0
    %v135 = vshrl.u32 %v134, 5
    %v136 = vand.u32 %v134, 31
    %v137 = vsub.s32 32, %v136
    %v138 = vshrl.u32 683565275, %v137
    %v139 = vshll.u32 683565275, %v136
    %v140 = vshrl.u32 2475754826, %v137
    %v141 = vor.u32 %v139, %v140
    %v142 = vshll.u32 2475754826, %v136
    %v143 = vshrl.u32 2131351028, %v137
    %v144 = vor.u32 %v142, %v143
    %v145 = vshll.u32 2131351028, %v136
    %v146 = vshrl.u32 2102212464, %v137
    %v147 = vor.u32 %v145, %v146
    %v148 = vshll.u32 2102212464, %v136
    %v149 = vshrl.u32 920167782, %v137
    %v150 = vor.u32 %v148, %v149
    %v151 = vshll.u32 920167782, %v136
    %v152 = vshrl.u32 1326507024, %v137
    %v153 = vor.u32 %v151, %v152
    %vm154 = vcmp.lt.s32.totalorder %v135, 1
    %vm155 = vcmp.lt.s32.totalorder %v135, 2
    %vm156 = vcmp.lt.s32.totalorder %v135, 3
    %vm157 = vcmp.lt.s32.totalorder %v135, 4
    %v158 = vsel %vm154, %v138, %v141
    %v159 = vsel %vm157, %v147, 2102212464
    %v160 = vsel %vm156, %v144, %v159
    %v161 = vsel %vm155, %v158, %v160
    %v162 = vsel %vm154, %v141, %v144
    %v163 = vsel %vm157, %v150, 920167782
    %v164 = vsel %vm156, %v147, %v163
    %v165 = vsel %vm155, %v162, %v164
    %v166 = vsel %vm154, %v144, %v147
    %v167 = vsel %vm157, %v153, 1326507024
    %v168 = vsel %vm156, %v150, %v167
    %v169 = vsel %vm155, %v166, %v168
    %v170 = vshll.u32 %v130, 8
    %v171 = vand.u32 %v170, 65535
    %v172 = vshrl.u32 %v170, 16
    %v173 = vand.u32 %v169, 65535
    %v174 = vshrl.u32 %v169, 16
    %v175 = vmul.u32 %v171, %v173
    %v176 = vmul.u32 %v171, %v174
    %v177 = vmul.u32 %v172, %v173
    %v178 = vmul.u32 %v172, %v174
    %v179 = vshll.u32 %v176, 16
    %v180 = vshrl.u32 %v176, 16
    %v181 = vshll.u32 %v177, 16
    %v182 = vshrl.u32 %v177, 16
    %vm183 = vc.u32 %v175, %v179
    %v184 = vsel %vm183, 1, 0
    %v185 = vadd.s32 %v175, %v179
    %v186 = vadd.s32 %v178, %v184
    %vm187 = vc.u32 %v185, %v181
    %v188 = vsel %vm187, 1, 0
    %v189 = vadd.s32 %v185, %v181
    %v190 = vadd.s32 %v186, %v188
    %v191 = vadd.s32 %v190, %v180
    %v192 = vadd.s32 %v191, %v182
    %v193 = vand.u32 %v170, 65535
    %v194 = vshrl.u32 %v170, 16
    %v195 = vand.u32 %v165, 65535
    %v196 = vshrl.u32 %v165, 16
    %v197 = vmul.u32 %v193, %v195
    %v198 = vmul.u32 %v193, %v196
    %v199 = vmul.u32 %v194, %v195
    %v200 = vmul.u32 %v194, %v196
    %v201 = vshll.u32 %v198, 16
    %v202 = vshrl.u32 %v198, 16
    %v203 = vshll.u32 %v199, 16
    %v204 = vshrl.u32 %v199, 16
    %vm205 = vc.u32 %v197, %v201
    %v206 = vsel %vm205, 1, 0
    %v207 = vadd.s32 %v197, %v201
    %v208 = vadd.s32 %v200, %v206
    %vm209 = vc.u32 %v207, %v203
    %v210 = vsel %vm209, 1, 0
    %v211 = vadd.s32 %v207, %v203
    %v212 = vadd.s32 %v208, %v210
    %v213 = vadd.s32 %v212, %v202
    %v214 = vadd.s32 %v213, %v204
    %v215 = vmul.u32 %v170, %v161
    %v216 = vadd.s32 %v192, %v211
    %vm217 = vc.u32 %v192, %v211
    %v218 = vadd.s32 %v214, 1
    %v219 = vsel %vm217, %v218, %v214
    %v220 = vadd.s32 %v215, %v219
    %v221 = vadd.s32 %v220, 536870912
    %v222 = vshrl.u32 %v221, 30
    %v223 = vshll.u32 %v222, 30
    %v224 = vsub.s32 %v220, %v223
    %vm225 = vcmp.lt.s32.totalorder %v224, 0
    %v226 = vsub.s32 0, %v224
    %v227 = vsel %vm225, %v226, %v224
    %v228 = vclz %v227
    %v229 = vsub.s32 %v228, 2
    %vm230 = vcmp.gt.s32.totalorder 0, %v229
    %v231 = vsel %vm230, 0, %v229
    %v232 = vsub.s32 32, %v231
    %v233 = vshll.u32 %v224, %v231
    %v234 = vshrl.u32 %v216, %v232
    %v235 = vor.u32 %v233, %v234
    %v236 = vsub.s32 4294967266, %v231
    %v237 = vadd.s32 %v236, 127
    %v238 = vshll.u32 %v237, 23
    %v239 = vor.u32 4788187, %v238
    %v240 = vand.u32 2147483647, %v239
    %v242 = vcvt.s32.f32 %v235
    %v243 = vmul.f32 %v242, %v240
    %v244 = vxor.u32 %v243, 2147483648
    %v245 = vsel %vm124, %v244, %v243
    %v246 = vsub.s32 4, %v222
    %v247 = vsel %vm124, %v246, %v222
    %v248 = vsel %vm123, %v118, %v245
    %v249 = vsel %vm123, 0, %v247
    %v250 = vmul.f32 %v248, %v248
    %v251 = vmul.f32 %v250, -0.001358992
    %v252 = vadd.f32 %v251, 0.041655596
    %v253 = vmul.f32 %v250, %v252
    %v254 = vadd.f32 %v253, -0.4999988
    %v255 = vmul.f32 %v250, %v254
    %v256 = vadd.f32 1.0, %v255
    %v257 = vmul.f32 %v248, %v248
    %v258 = vmul.f32 %v257, -0.00019511016
    %v259 = vadd.f32 %v258, 0.008332121
    %v260 = vmul.f32 %v257, %v259
    %v261 = vadd.f32 %v260, -0.16666654
    %v262 = vmul.f32 %v257, %v261
    %v263 = vadd.f32 %v262, 1.0
    %v264 = vmul.f32 %v263, %v248
    %vm265 = vweird.f32 %v118
    %v266 = vand.u32 %v249, 3
    %vm267 = vcmp.lt.s32.totalorder %v266, 2
    %vm268 = vcmp.eq.s32.totalorder %v266, 0
    %v269 = vxor.u32 %v264, 2147483648
    %v270 = vsel %vm268, %v256, %v269
    %vm271 = vcmp.eq.s32.totalorder %v266, 2
    %v272 = vxor.u32 %v256, 2147483648
    %v273 = vsel %vm271, %v272, %v264
    %v274 = vsel %vm267, %v270, %v273
    %v275 = vsel %vm265, nan, %v274
    %v276 = vand.u32 2147483647, %v119
    %vm277 = vcmp.le.f32.partialorder %v276, 0.7853982
    %vm278 = vcmp.lt.s32.totalorder %v119, 0
    %v279 = vand.u32 %v119, 2139095040
    %v280 = vshrl.u32 %v279, 23
    %v281 = vsub.s32 %v280, 127
    %v282 = vand.u32 2147483647, %v119
    %v283 = vand.u32 %v282, 8388607
    %v284 = vor.u32 %v283, 8388608
    %v285 = vsub.s32 0, %v284
    %v286 = vadd.s32 %v281, 1
    %vm287 = vcmp.gt.s32.totalorder %v286, 0
    %v288 = vsel %vm287, %v286, 0
    %v289 = vshrl.u32 %v288, 5
    %v290 = vand.u32 %v288, 31
    %v291 = vsub.s32 32, %v290
    %v292 = vshrl.u32 683565275, %v291
    %v293 = vshll.u32 683565275, %v290
    %v294 = vshrl.u32 2475754826, %v291
    %v295 = vor.u32 %v293, %v294
    %v296 = vshll.u32 2475754826, %v290
    %v297 = vshrl.u32 2131351028, %v291
    %v298 = vor.u32 %v296, %v297
    %v299 = vshll.u32 2131351028, %v290
    %v300 = vshrl.u32 2102212464, %v291
    %v301 = vor.u32 %v299, %v300
    %v302 = vshll.u32 2102212464, %v290
    %v303 = vshrl.u32 920167782, %v291
    %v304 = vor.u32 %v302, %v303
    %v305 = vshll.u32 920167782, %v290
    %v306 = vshrl.u32 1326507024, %v291
    %v307 = vor.u32 %v305, %v306
    %vm308 = vcmp.lt.s32.totalorder %v289, 1
    %vm309 = vcmp.lt.s32.totalorder %v289, 2
    %vm310 = vcmp.lt.s32.totalorder %v289, 3
    %vm311 = vcmp.lt.s32.totalorder %v289, 4
    %v312 = vsel %vm308, %v292, %v295
    %v313 = vsel %vm311, %v301, 2102212464
    %v314 = vsel %vm310, %v298, %v313
    %v315 = vsel %vm309, %v312, %v314
    %v316 = vsel %vm308, %v295, %v298
    %v317 = vsel %vm311, %v304, 920167782
    %v318 = vsel %vm310, %v301, %v317
    %v319 = vsel %vm309, %v316, %v318
    %v320 = vsel %vm308, %v298, %v301
    %v321 = vsel %vm311, %v307, 1326507024
    %v322 = vsel %vm310, %v304, %v321
    %v323 = vsel %vm309, %v320, %v322
    %v324 = vshll.u32 %v284, 8
    %v325 = vand.u32 %v324, 65535
    %v326 = vshrl.u32 %v324, 16
    %v327 = vand.u32 %v323, 65535
    %v328 = vshrl.u32 %v323, 16
    %v329 = vmul.u32 %v325, %v327
    %v330 = vmul.u32 %v325, %v328
    %v331 = vmul.u32 %v326, %v327
    %v332 = vmul.u32 %v326, %v328
    %v333 = vshll.u32 %v330, 16
    %v334 = vshrl.u32 %v330, 16
    %v335 = vshll.u32 %v331, 16
    %v336 = vshrl.u32 %v331, 16
    %vm337 = vc.u32 %v329, %v333
    %v338 = vsel %vm337, 1, 0
    %v339 = vadd.s32 %v329, %v333
    %v340 = vadd.s32 %v332, %v338
    %vm341 = vc.u32 %v339, %v335
    %v342 = vsel %vm341, 1, 0
    %v343 = vadd.s32 %v339, %v335
    %v344 = vadd.s32 %v340, %v342
    %v345 = vadd.s32 %v344, %v334
    %v346 = vadd.s32 %v345, %v336
    %v347 = vand.u32 %v324, 65535
    %v348 = vshrl.u32 %v324, 16
    %v349 = vand.u32 %v319, 65535
    %v350 = vshrl.u32 %v319, 16
    %v351 = vmul.u32 %v347, %v349
    %v352 = vmul.u32 %v347, %v350
    %v353 = vmul.u32 %v348, %v349
    %v354 = vmul.u32 %v348, %v350
    %v355 = vshll.u32 %v352, 16
    %v356 = vshrl.u32 %v352, 16
    %v357 = vshll.u32 %v353, 16
    %v358 = vshrl.u32 %v353, 16
    %vm359 = vc.u32 %v351, %v355
    %v360 = vsel %vm359, 1, 0
    %v361 = vadd.s32 %v351, %v355
    %v362 = vadd.s32 %v354, %v360
    %vm363 = vc.u32 %v361, %v357
    %v364 = vsel %vm363, 1, 0
    %v365 = vadd.s32 %v361, %v357
    %v366 = vadd.s32 %v362, %v364
    %v367 = vadd.s32 %v366, %v356
    %v368 = vadd.s32 %v367, %v358
    %v369 = vmul.u32 %v324, %v315
    %v370 = vadd.s32 %v346, %v365
    %vm371 = vc.u32 %v346, %v365
    %v372 = vadd.s32 %v368, 1
    %v373 = vsel %vm371, %v372, %v368
    %v374 = vadd.s32 %v369, %v373
    %v375 = vadd.s32 %v374, 536870912
    %v376 = vshrl.u32 %v375, 30
    %v377 = vshll.u32 %v376, 30
    %v378 = vsub.s32 %v374, %v377
    %vm379 = vcmp.lt.s32.totalorder %v378, 0
    %v380 = vsub.s32 0, %v378
    %v381 = vsel %vm379, %v380, %v378
    %v382 = vclz %v381
    %v383 = vsub.s32 %v382, 2
    %vm384 = vcmp.gt.s32.totalorder 0, %v383
    %v385 = vsel %vm384, 0, %v383
    %v386 = vsub.s32 32, %v385
    %v387 = vshll.u32 %v378, %v385
    %v388 = vshrl.u32 %v370, %v386
    %v389 = vor.u32 %v387, %v388
    %v390 = vsub.s32 4294967266, %v385
    %v391 = vadd.s32 %v390, 127
    %v392 = vshll.u32 %v391, 23
    %v393 = vor.u32 4788187, %v392
    %v394 = vand.u32 2147483647, %v393
    %v396 = vcvt.s32.f32 %v389
    %v397 = vmul.f32 %v396, %v394
    %v398 = vxor.u32 %v397, 2147483648
    %v399 = vsel %vm278, %v398, %v397
    %v400 = vsub.s32 4, %v376
    %v401 = vsel %vm278, %v400, %v376
    %v402 = vsel %vm277, %v119, %v399
    %v403 = vsel %vm277, 0, %v401
    %v404 = vmul.f32 %v402, %v402
    %v405 = vmul.f32 %v404, -0.001358992
    %v406 = vadd.f32 %v405, 0.041655596
    %v407 = vmul.f32 %v404, %v406
    %v408 = vadd.f32 %v407, -0.4999988
    %v409 = vmul.f32 %v404, %v408
    %v410 = vadd.f32 1.0, %v409
    %v411 = vmul.f32 %v402, %v402
    %v412 = vmul.f32 %v411, -0.00019511016
    %v413 = vadd.f32 %v412, 0.008332121
    %v414 = vmul.f32 %v411, %v413
    %v415 = vadd.f32 %v414, -0.16666654
    %v416 = vmul.f32 %v411, %v415
    %v417 = vadd.f32 %v416, 1.0
    %v418 = vmul.f32 %v417, %v402
    %vm419 = vweird.f32 %v119
    %v420 = vand.u32 %v403, 3
    %vm421 = vcmp.lt.s32.totalorder %v420, 2
    %vm422 = vcmp.eq.s32.totalorder %v420, 0
    %v423 = vxor.u32 %v418, 2147483648
    %v424 = vsel %vm422, %v410, %v423
    %vm425 = vcmp.eq.s32.totalorder %v420, 2
    %v426 = vxor.u32 %v410, 2147483648
    %v427 = vsel %vm425, %v426, %v418
    %v428 = vsel %vm421, %v424, %v427
    %v429 = vsel %vm419, nan, %v428
    %v430 = vand.u32 2147483647, %v120
    %vm431 = vcmp.le.f32.partialorder %v430, 0.7853982
    %vm432 = vcmp.lt.s32.totalorder %v120, 0
    %v433 = vand.u32 %v120, 2139095040
    %v434 = vshrl.u32 %v433, 23
    %v435 = vsub.s32 %v434, 127
    %v436 = vand.u32 2147483647, %v120
    %v437 = vand.u32 %v436, 8388607
    %v438 = vor.u32 %v437, 8388608
    %v439 = vsub.s32 0, %v438
    %v440 = vadd.s32 %v435, 1
    %vm441 = vcmp.gt.s32.totalorder %v440, 0
    %v442 = vsel %vm441, %v440, 0
    %v443 = vshrl.u32 %v442, 5
    %v444 = vand.u32 %v442, 31
    %v445 = vsub.s32 32, %v444
    %v446 = vshrl.u32 683565275, %v445
    %v447 = vshll.u32 683565275, %v444
    %v448 = vshrl.u32 2475754826, %v445
    %v449 = vor.u32 %v447, %v448
    %v450 = vshll.u32 2475754826, %v444
    %v451 = vshrl.u32 2131351028, %v445
    %v452 = vor.u32 %v450, %v451
    %v453 = vshll.u32 2131351028, %v444
    %v454 = vshrl.u32 2102212464, %v445
    %v455 = vor.u32 %v453, %v454
    %v456 = vshll.u32 2102212464, %v444
    %v457 = vshrl.u32 920167782, %v445
    %v458 = vor.u32 %v456, %v457
    %v459 = vshll.u32 920167782, %v444
    %v460 = vshrl.u32 1326507024, %v445
    %v461 = vor.u32 %v459, %v460
    %vm462 = vcmp.lt.s32.totalorder %v443, 1
    %vm463 = vcmp.lt.s32.totalorder %v443, 2
    %vm464 = vcmp.lt.s32.totalorder %v443, 3
    %vm465 = vcmp.lt.s32.totalorder %v443, 4
    %v466 = vsel %vm462, %v446, %v449
    %v467 = vsel %vm465, %v455, 2102212464
    %v468 = vsel %vm464, %v452, %v467
    %v469 = vsel %vm463, %v466, %v468
    %v470 = vsel %vm462, %v449, %v452
    %v471 = vsel %vm465, %v458, 920167782
    %v472 = vsel %vm464, %v455, %v471
    %v473 = vsel %vm463, %v470, %v472
    %v474 = vsel %vm462, %v452, %v455
    %v475 = vsel %vm465, %v461, 1326507024
    %v476 = vsel %vm464, %v458, %v475
    %v477 = vsel %vm463, %v474, %v476
    %v478 = vshll.u32 %v438, 8
    %v479 = vand.u32 %v478, 65535
    %v480 = vshrl.u32 %v478, 16
    %v481 = vand.u32 %v477, 65535
    %v482 = vshrl.u32 %v477, 16
    %v483 = vmul.u32 %v479, %v481
    %v484 = vmul.u32 %v479, %v482
    %v485 = vmul.u32 %v480, %v481
    %v486 = vmul.u32 %v480, %v482
    %v487 = vshll.u32 %v484, 16
    %v488 = vshrl.u32 %v484, 16
    %v489 = vshll.u32 %v485, 16
    %v490 = vshrl.u32 %v485, 16
    %vm491 = vc.u32 %v483, %v487
    %v492 = vsel %vm491, 1, 0
    %v493 = vadd.s32 %v483, %v487
    %v494 = vadd.s32 %v486, %v492
    %vm495 = vc.u32 %v493, %v489
    %v496 = vsel %vm495, 1, 0
    %v497 = vadd.s32 %v493, %v489
    %v498 = vadd.s32 %v494, %v496
    %v499 = vadd.s32 %v498, %v488
    %v500 = vadd.s32 %v499, %v490
    %v501 = vand.u32 %v478, 65535
    %v502 = vshrl.u32 %v478, 16
    %v503 = vand.u32 %v473, 65535
    %v504 = vshrl.u32 %v473, 16
    %v505 = vmul.u32 %v501, %v503
    %v506 = vmul.u32 %v501, %v504
    %v507 = vmul.u32 %v502, %v503
    %v508 = vmul.u32 %v502, %v504
    %v509 = vshll.u32 %v506, 16
    %v510 = vshrl.u32 %v506, 16
    %v511 = vshll.u32 %v507, 16
    %v512 = vshrl.u32 %v507, 16
    %vm513 = vc.u32 %v505, %v509
    %v514 = vsel %vm513, 1, 0
    %v515 = vadd.s32 %v505, %v509
    %v516 = vadd.s32 %v508, %v514
    %vm517 = vc.u32 %v515, %v511
    %v518 = vsel %vm517, 1, 0
    %v519 = vadd.s32 %v515, %v511
    %v520 = vadd.s32 %v516, %v518
    %v521 = vadd.s32 %v520, %v510
    %v522 = vadd.s32 %v521, %v512
    %v523 = vmul.u32 %v478, %v469
    %v524 = vadd.s32 %v500, %v519
    %vm525 = vc.u32 %v500, %v519
    %v526 = vadd.s32 %v522, 1
    %v527 = vsel %vm525, %v526, %v522
    %v528 = vadd.s32 %v523, %v527
    %v529 = vadd.s32 %v528, 536870912
    %v530 = vshrl.u32 %v529, 30
    %v531 = vshll.u32 %v530, 30
    %v532 = vsub.s32 %v528, %v531
    %vm533 = vcmp.lt.s32.totalorder %v532, 0
    %v534 = vsub.s32 0, %v532
    %v535 = vsel %vm533, %v534, %v532
    %v536 = vclz %v535
    %v537 = vsub.s32 %v536, 2
    %vm538 = vcmp.gt.s32.totalorder 0, %v537
    %v539 = vsel %vm538, 0, %v537
    %v540 = vsub.s32 32, %v539
    %v541 = vshll.u32 %v532, %v539
    %v542 = vshrl.u32 %v524, %v540
    %v543 = vor.u32 %v541, %v542
    %v544 = vsub.s32 4294967266, %v539
    %v545 = vadd.s32 %v544, 127
    %v546 = vshll.u32 %v545, 23
    %v547 = vor.u32 4788187, %v546
    %v548 = vand.u32 2147483647, %v547
    %v550 = vcvt.s32.f32 %v543
    %v551 = vmul.f32 %v550, %v548
    %v552 = vxor.u32 %v551, 2147483648
    %v553 = vsel %vm432, %v552, %v551
    %v554 = vsub.s32 4, %v530
    %v555 = vsel %vm432, %v554, %v530
    %v556 = vsel %vm431, %v120, %v553
    %v557 = vsel %vm431, 0, %v555
    %v558 = vmul.f32 %v556, %v556
    %v559 = vmul.f32 %v558, -0.001358992
    %v560 = vadd.f32 %v559, 0.041655596
    %v561 = vmul.f32 %v558, %v560
    %v562 = vadd.f32 %v561, -0.4999988
    %v563 = vmul.f32 %v558, %v562
    %v564 = vadd.f32 1.0, %v563
    %v565 = vmul.f32 %v556, %v556
    %v566 = vmul.f32 %v565, -0.00019511016
    %v567 = vadd.f32 %v566, 0.008332121
    %v568 = vmul.f32 %v565, %v567
    %v569 = vadd.f32 %v568, -0.16666654
    %v570 = vmul.f32 %v565, %v569
    %v571 = vadd.f32 %v570, 1.0
    %v572 = vmul.f32 %v571, %v556
    %vm573 = vweird.f32 %v120
    %v574 = vand.u32 %v557, 3
    %vm575 = vcmp.lt.s32.totalorder %v574, 2
    %vm576 = vcmp.eq.s32.totalorder %v574, 0
    %v577 = vxor.u32 %v572, 2147483648
    %v578 = vsel %vm576, %v564, %v577
    %vm579 = vcmp.eq.s32.totalorder %v574, 2
    %v580 = vxor.u32 %v564, 2147483648
    %v581 = vsel %vm579, %v580, %v572
    %v582 = vsel %vm575, %v578, %v581
    %v583 = vsel %vm573, nan, %v582
    %v584 = vand.u32 2147483647, %v121
    %vm585 = vcmp.le.f32.partialorder %v584, 0.7853982
    %vm586 = vcmp.lt.s32.totalorder %v121, 0
    %v587 = vand.u32 %v121, 2139095040
    %v588 = vshrl.u32 %v587, 23
    %v589 = vsub.s32 %v588, 127
    %v590 = vand.u32 2147483647, %v121
    %v591 = vand.u32 %v590, 8388607
    %v592 = vor.u32 %v591, 8388608
    %v593 = vsub.s32 0, %v592
    %v594 = vadd.s32 %v589, 1
    %vm595 = vcmp.gt.s32.totalorder %v594, 0
    %v596 = vsel %vm595, %v594, 0
    %v597 = vshrl.u32 %v596, 5
    %v598 = vand.u32 %v596, 31
    %v599 = vsub.s32 32, %v598
    %v600 = vshrl.u32 683565275, %v599
    %v601 = vshll.u32 683565275, %v598
    %v602 = vshrl.u32 2475754826, %v599
    %v603 = vor.u32 %v601, %v602
    %v604 = vshll.u32 2475754826, %v598
    %v605 = vshrl.u32 2131351028, %v599
    %v606 = vor.u32 %v604, %v605
    %v607 = vshll.u32 2131351028, %v598
    %v608 = vshrl.u32 2102212464, %v599
    %v609 = vor.u32 %v607, %v608
    %v610 = vshll.u32 2102212464, %v598
    %v611 = vshrl.u32 920167782, %v599
    %v612 = vor.u32 %v610, %v611
    %v613 = vshll.u32 920167782, %v598
    %v614 = vshrl.u32 1326507024, %v599
    %v615 = vor.u32 %v613, %v614
    %vm616 = vcmp.lt.s32.totalorder %v597, 1
    %vm617 = vcmp.lt.s32.totalorder %v597, 2
    %vm618 = vcmp.lt.s32.totalorder %v597, 3
    %vm619 = vcmp.lt.s32.totalorder %v597, 4
    %v620 = vsel %vm616, %v600, %v603
    %v621 = vsel %vm619, %v609, 2102212464
    %v622 = vsel %vm618, %v606, %v621
    %v623 = vsel %vm617, %v620, %v622
    %v624 = vsel %vm616, %v603, %v606
    %v625 = vsel %vm619, %v612, 920167782
    %v626 = vsel %vm618, %v609, %v625
    %v627 = vsel %vm617, %v624, %v626
    %v628 = vsel %vm616, %v606, %v609
    %v629 = vsel %vm619, %v615, 1326507024
    %v630 = vsel %vm618, %v612, %v629
    %v631 = vsel %vm617, %v628, %v630
    %v632 = vshll.u32 %v592, 8
    %v633 = vand.u32 %v632, 65535
    %v634 = vshrl.u32 %v632, 16
    %v635 = vand.u32 %v631, 65535
    %v636 = vshrl.u32 %v631, 16
    %v637 = vmul.u32 %v633, %v635
    %v638 = vmul.u32 %v633, %v636
    %v639 = vmul.u32 %v634, %v635
    %v640 = vmul.u32 %v634, %v636
    %v641 = vshll.u32 %v638, 16
    %v642 = vshrl.u32 %v638, 16
    %v643 = vshll.u32 %v639, 16
    %v644 = vshrl.u32 %v639, 16
    %vm645 = vc.u32 %v637, %v641
    %v646 = vsel %vm645, 1, 0
    %v647 = vadd.s32 %v637, %v641
    %v648 = vadd.s32 %v640, %v646
    %vm649 = vc.u32 %v647, %v643
    %v650 = vsel %vm649, 1, 0
    %v651 = vadd.s32 %v647, %v643
    %v652 = vadd.s32 %v648, %v650
    %v653 = vadd.s32 %v652, %v642
    %v654 = vadd.s32 %v653, %v644
    %v655 = vand.u32 %v632, 65535
    %v656 = vshrl.u32 %v632, 16
    %v657 = vand.u32 %v627, 65535
    %v658 = vshrl.u32 %v627, 16
    %v659 = vmul.u32 %v655, %v657
    %v660 = vmul.u32 %v655, %v658
    %v661 = vmul.u32 %v656, %v657
    %v662 = vmul.u32 %v656, %v658
    %v663 = vshll.u32 %v660, 16
    %v664 = vshrl.u32 %v660, 16
    %v665 = vshll.u32 %v661, 16
    %v666 = vshrl.u32 %v661, 16
    %vm667 = vc.u32 %v659, %v663
    %v668 = vsel %vm667, 1, 0
    %v669 = vadd.s32 %v659, %v663
    %v670 = vadd.s32 %v662, %v668
    %vm671 = vc.u32 %v669, %v665
    %v672 = vsel %vm671, 1, 0
    %v673 = vadd.s32 %v669, %v665
    %v674 = vadd.s32 %v670, %v672
    %v675 = vadd.s32 %v674, %v664
    %v676 = vadd.s32 %v675, %v666
    %v677 = vmul.u32 %v632, %v623
    %v678 = vadd.s32 %v654, %v673
    %vm679 = vc.u32 %v654, %v673
    %v680 = vadd.s32 %v676, 1
    %v681 = vsel %vm679, %v680, %v676
    %v682 = vadd.s32 %v677, %v681
    %v683 = vadd.s32 %v682, 536870912
    %v684 = vshrl.u32 %v683, 30
    %v685 = vshll.u32 %v684, 30
    %v686 = vsub.s32 %v682, %v685
    %vm687 = vcmp.lt.s32.totalorder %v686, 0
    %v688 = vsub.s32 0, %v686
    %v689 = vsel %vm687, %v688, %v686
    %v690 = vclz %v689
    %v691 = vsub.s32 %v690, 2
    %vm692 = vcmp.gt.s32.totalorder 0, %v691
    %v693 = vsel %vm692, 0, %v691
    %v694 = vsub.s32 32, %v693
    %v695 = vshll.u32 %v686, %v693
    %v696 = vshrl.u32 %v678, %v694
    %v697 = vor.u32 %v695, %v696
    %v698 = vsub.s32 4294967266, %v693
    %v699 = vadd.s32 %v698, 127
    %v700 = vshll.u32 %v699, 23
    %v701 = vor.u32 4788187, %v700
    %v702 = vand.u32 2147483647, %v701
    %v704 = vcvt.s32.f32 %v697
    %v705 = vmul.f32 %v704, %v702
    %v706 = vxor.u32 %v705, 2147483648
    %v707 = vsel %vm586, %v706, %v705
    %v708 = vsub.s32 4, %v684
    %v709 = vsel %vm586, %v708, %v684
    %v710 = vsel %vm585, %v121, %v707
    %v711 = vsel %vm585, 0, %v709
    %v712 = vmul.f32 %v710, %v710
    %v713 = vmul.f32 %v712, -0.001358992
    %v714 = vadd.f32 %v713, 0.041655596
    %v715 = vmul.f32 %v712, %v714
    %v716 = vadd.f32 %v715, -0.4999988
    %v717 = vmul.f32 %v712, %v716
    %v718 = vadd.f32 1.0, %v717
    %v719 = vmul.f32 %v710, %v710
    %v720 = vmul.f32 %v719, -0.00019511016
    %v721 = vadd.f32 %v720, 0.008332121
    %v722 = vmul.f32 %v719, %v721
    %v723 = vadd.f32 %v722, -0.16666654
    %v724 = vmul.f32 %v719, %v723
    %v725 = vadd.f32 %v724, 1.0
    %v726 = vmul.f32 %v725, %v710
    %vm727 = vweird.f32 %v121
    %v728 = vand.u32 %v711, 3
    %vm729 = vcmp.lt.s32.totalorder %v728, 2
    %vm730 = vcmp.eq.s32.totalorder %v728, 0
    %v731 = vxor.u32 %v726, 2147483648
    %v732 = vsel %vm730, %v718, %v731
    %vm733 = vcmp.eq.s32.totalorder %v728, 2
    %v734 = vxor.u32 %v718, 2147483648
    %v735 = vsel %vm733, %v734, %v726
    %v736 = vsel %vm729, %v732, %v735
    %v737 = vsel %vm727, nan, %v736
    %v738 = vld [vmem:[%s3] sm:$0xf]
    %v740 = vperm.slane %v738, 0
    %v741 = vperm.slane %v738, 1
    %v742 = vperm.slane %v738, 2
    %v743 = vperm.slane %v738, 3
    %v748 = vmul.f32 %v275, %v740
    %v749 = vmul.f32 %v429, %v741
    %v750 = vmul.f32 %v583, %v742
    %v751 = vmul.f32 %v737, %v743
    %v752 = vadd.f32 %v748, %v749
    %753 = vadd.xlane.f32.xlu0 %v752
    %v754 = vpop.xlane.xlu0 %753
    %v755 = vadd.f32 %v750, %v751
    %756 = vadd.xlane.f32.xlu0 %v755
    %v757 = vpop.xlane.xlu0 %756
    %vm758 = vcmask 7168
    %v759 = vsel %vm758, %v754, %v757
    %v760 = vld [vmem:[%s4] sm:$0x1]
    %v762 = vperm.slane %v760, 0
    %v764 = vadd.f32 %v759, %v762
    %vm765 = vcmask 15360
    %766 = vst.msk [vmem:[%s5] sm:$0xff] %vm765, %v764
    // Predicated region
    $region26: #{tpu_custom_call.1} parent=1 // pred_check
      _
    $region27: #{tpu_custom_call.1} parent=1 // pred_check_branch
      %768 = sbr.rel (0) target = $region29
    $region28: #{tpu_custom_call.1} parent=1 // pred_region
      _
    $region29: #{tpu_custom_call.1} parent=1 // pred_fallthru
      _
    // Predicated region
    $region30: #{tpu_custom_call.1} parent=1 // pred_check
      _
    $region31: #{tpu_custom_call.1} parent=1 // pred_check_branch
      %770 = sbr.rel (0) target = $region33
    $region32: #{tpu_custom_call.1} parent=1 // pred_region
      _
    $region33: #{tpu_custom_call.1} parent=1 // pred_fallthru
      _
    %771 = vsyncpa [#allocation3], 1

</llo_original>
